<compile_context>
chip_gen: v5e
topology: v5e:2x2
jax: 0.10.0
libtpu: 0.0.40
codegen_flags: <defaults>
</compile_context>

<pallas_src>
import math
import functools

import jax
import jax.numpy as jnp
from jax import lax
from jax.experimental import pallas as pl
from jax.experimental.pallas import tpu as pltpu


# --------------------------- hardware helpers ------------------------------ #
@functools.lru_cache(maxsize=1)
def _tpu_vmem_bytes():
    """Per-core VMEM capacity; conservative 64 MiB (v7x) fallback."""
    try:
        return int(pltpu.get_tpu_info().vmem_capacity_bytes)
    except Exception:
        return 64 * 1024 * 1024


def _largest_aligned_divisor(dim, target, align):
    """Largest divisor of `dim` that is <= target and a multiple of `align`.
    Returns `dim` when dim <= target, and falls back to the full dim when no
    aligned divisor exists (full dims always satisfy the (8,128) rule).
    # TODO(synk): pad awkward (prime-ish) dims to a tile multiple instead of
    # the full-dim fallback."""
    if dim <= target:
        return dim
    t = (min(target, dim) // align) * align
    while t >= align:
        if dim % t == 0:
            return t
        t -= align
    return dim


# ----------------------------- Linear kernel ------------------------------- #
def _linear_kernel(x_ref, w_ref, b_ref, o_ref, acc_ref):
    """One (tm, tn) output tile accumulated over the K grid axis."""
    @pl.when(pl.program_id(2) == 0)
    def _():
        acc_ref[...] = jnp.zeros_like(acc_ref)

    # Canonical (m, k) x (k, n) MXU feed: weights are pre-transposed to
    # (Din, Dout) once at parameter-prep time, so no per-tile transpose.
    acc_ref[...] += jnp.dot(x_ref[...], w_ref[...],
                            preferred_element_type=jnp.float32)

    @pl.when(pl.program_id(2) == pl.num_programs(2) - 1)
    def _():
        o_ref[...] = (acc_ref[...] + b_ref[...].astype(jnp.float32)
                      ).astype(o_ref.dtype)


def linear(x, w_t, b, *, tm=512, tn=256, tk=512):
    """y = x @ w_t + b    (x: (N, Din), w_t: (Din, Dout), b: (Dout,))."""
    n, din = x.shape
    dout = w_t.shape[1]
    tm = _largest_aligned_divisor(n, tm, 8)
    tn = _largest_aligned_divisor(dout, tn, 128)
    tk = _largest_aligned_divisor(din, tk, 128)
    grid = (n // tm, dout // tn, din // tk)
    vmem = _tpu_vmem_bytes()
    return pl.pallas_call(
        _linear_kernel,
        out_shape=jax.ShapeDtypeStruct((n, dout), x.dtype),
        grid=grid,
        in_specs=[
            pl.BlockSpec((tm, tk), lambda i, j, kb: (i, kb)),
            pl.BlockSpec((tk, tn), lambda i, j, kb: (kb, j)),
            pl.BlockSpec((1, tn), lambda i, j, kb: (0, j)),
        ],
        out_specs=pl.BlockSpec((tm, tn), lambda i, j, kb: (i, j)),
        scratch_shapes=[pltpu.VMEM((tm, tn), jnp.float32)],
        compiler_params=pltpu.CompilerParams(
            dimension_semantics=("parallel", "parallel", "arbitrary"),
            vmem_limit_bytes=int(vmem * 3 // 4)),
    )(x, w_t, b.reshape(1, dout))


# ------------------------ Flash attention kernel --------------------------- #
def _flash_kernel(*refs, has_mask):
    if has_mask:
        q_ref, k_ref, v_ref, mask_ref, o_ref, m_sc, l_sc, acc_sc = refs
    else:
        q_ref, k_ref, v_ref, o_ref, m_sc, l_sc, acc_sc = refs
        mask_ref = None

    hc = q_ref.shape[3]
    dk = q_ref.shape[4]
    ki = pl.program_id(3)

    @pl.when(ki == 0)
    def _():
        m_sc[...] = jnp.full_like(m_sc, -jnp.inf)
        l_sc[...] = jnp.zeros_like(l_sc)
        acc_sc[...] = jnp.zeros_like(acc_sc)

    if has_mask:
        keep = mask_ref[0]            # (1|hc, 1|Tq, Tk), int32, static shape

    # Per-head online-softmax update.  Heads are unrolled (hc is small); each
    # head is a pair of plain 2-D MXU matmuls with last-dim contraction, so no
    # in-kernel transposes or relayouts are needed.
    # TODO(synk): switch to lax.fori_loop over heads for very large head
    # chunks to bound vreg live ranges.
    for h in range(hc):
        q_h = q_ref[0, :, 0, h, :]                                 # (Tq, dk)
        k_h = k_ref[0, :, 0, h, :]                                 # (Tk, dk)
        v_h = v_ref[0, :, 0, h, :]                                 # (Tk, dk)

        # s[i, j] = sum_d q[i, d] * k[j, d]  (K fed untransposed)
        s = lax.dot_general(q_h, k_h,
                            dimension_numbers=(((1,), (1,)), ((), ())),
                            preferred_element_type=jnp.float32)    # (Tq, Tk)
        if has_mask:
            keep_h = keep[h] if keep.shape[0] > 1 else keep[0]
            s = jnp.where(keep_h == 0, jnp.float32(-1.0e9), s)

        m_prev = m_sc[h]                                           # (Tq, 1)
        m_new = jnp.maximum(m_prev, jnp.max(s, axis=-1, keepdims=True))
        alpha = jnp.exp(m_prev - m_new)
        p = jnp.exp(s - m_new)
        l_sc[h] = alpha * l_sc[h] + jnp.sum(p, axis=-1, keepdims=True)
        acc_sc[h] = alpha * acc_sc[h] + jnp.dot(
            p.astype(v_h.dtype), v_h, preferred_element_type=jnp.float32)
        m_sc[h] = m_new

    @pl.when(ki == pl.num_programs(3) - 1)
    def _():
        # Normalize and pack heads into a lane-dense (Tq, hc*dk) output slab;
        # the HBM writeback of this block is a single >=128-lane-wide DMA per
        # (batch, head-chunk, q-tile).
        for h in range(hc):
            o_ref[0, :, h * dk:(h + 1) * dk] = (
                acc_sc[h] * pl.reciprocal(l_sc[h], approx=True)
            ).astype(o_ref.dtype)


def _pick_head_chunk(H, dk, Tq, Tk, itemsize, parallel_rest, budget_bytes):
    """Largest head chunk hc that (a) divides H, (b) is block-shape legal
    (hc == H, or hc % 8 == 0 and hc*dk % 128 == 0), (c) fits the per-step
    VMEM budget, and (d) keeps the parallel grid extent >= 2 (v7x megacore)."""
    cands = [c for c in range(1, H + 1)
             if H % c == 0 and (c == H or (c % 8 == 0 and (c * dk) % 128 == 0))]

    def footprint(c):
        io = 2 * itemsize * (c * Tq * dk + 2 * c * Tk * dk)   # q + k + v (x2 buf)
        io += 2 * itemsize * Tq * c * dk                       # out block (x2 buf)
        io += 2 * 4 * Tq * Tk                                  # mask block (int32)
        scratch = 4 * c * Tq * (dk + 2)                        # acc + m + l
        tmp = 3 * 4 * Tq * Tk                                  # per-head live temps
        return io + scratch + tmp

    best = cands[0]
    for c in cands:
        if footprint(c) <= budget_bytes and parallel_rest * (H // c) >= 2:
            best = c
    return best


def flash_mha(q_arr, pq, k_arr, pk, v_arr, pv, keep, B, S, H, dk):
    """q/k/v arrays: (B, S, P, H, dk) with P in {1, 3}; pq/pk/pv select the
    projection slot; keep: int32 keep-mask broadcastable to (B, H, S, S) or
    None.  Returns the attention output as a lane-dense (B, S, H*dk) array."""
    D = H * dk
    dtype = q_arr.dtype
    vmem = _tpu_vmem_bytes()
    budget = max(vmem // 3, 8 * 1024 * 1024)

    Tq = _largest_aligned_divisor(S, 256, 8)
    Tk = _largest_aligned_divisor(S, 512, 128)
    hc = _pick_head_chunk(H, dk, Tq, Tk, dtype.itemsize, B * (S // Tq), budget)
    grid = (B, H // hc, S // Tq, S // Tk)

    q_spec = pl.BlockSpec((1, Tq, 1, hc, dk),
                          lambda b, g, qi, ki, p=pq: (b, qi, p, g, 0))
    k_spec = pl.BlockSpec((1, Tk, 1, hc, dk),
                          lambda b, g, qi, ki, p=pk: (b, ki, p, g, 0))
    v_spec = pl.BlockSpec((1, Tk, 1, hc, dk),
                          lambda b, g, qi, ki, p=pv: (b, ki, p, g, 0))
    in_specs = [q_spec, k_spec, v_spec]
    inputs = [q_arr, k_arr, v_arr]

    has_mask = keep is not None
    if has_mask:
        Bm, Mh, Mq = keep.shape[0], keep.shape[1], keep.shape[2]
        mh_blk = hc if Mh != 1 else 1
        mq_blk = Tq if Mq != 1 else 1

        def mask_map(b, g, qi, ki, _Bm=Bm, _Mh=Mh, _Mq=Mq):
            return (b if _Bm != 1 else 0,
                    g if _Mh != 1 else 0,
                    qi if _Mq != 1 else 0,
                    ki)

        in_specs.append(pl.BlockSpec((1, mh_blk, mq_blk, Tk), mask_map))
        inputs.append(keep)

    return pl.pallas_call(
        functools.partial(_flash_kernel, has_mask=has_mask),
        out_shape=jax.ShapeDtypeStruct((B, S, D), dtype),
        grid=grid,
        in_specs=in_specs,
        out_specs=pl.BlockSpec((1, Tq, hc * dk), lambda b, g, qi, ki: (b, qi, g)),
        scratch_shapes=[
            pltpu.VMEM((hc, Tq, 1), jnp.float32),    # running max  m
            pltpu.VMEM((hc, Tq, 1), jnp.float32),    # running sum  l
            pltpu.VMEM((hc, Tq, dk), jnp.float32),   # running numerator
        ],
        compiler_params=pltpu.CompilerParams(
            dimension_semantics=("parallel", "parallel", "parallel", "arbitrary"),
            vmem_limit_bytes=int(vmem * 3 // 4)),
    )(*inputs)


# ------------------------- Full module forward ----------------------------- #
def prepare_params(params, h):
    """One-time parameter prep: transpose to (Din, Dout) for the canonical
    (m,k)x(k,n) MXU feed, fold 1/sqrt(d_k) into W_Q/b_Q, and pre-build the
    fused QKV weight used by the self-attention path."""
    (wq, bq), (wk, bk), (wv, bv), (wo, bo) = params
    d_model = wq.shape[0]
    scale = 1.0 / math.sqrt(d_model // h)
    wq_s, bq_s = wq * scale, bq * scale
    return {
        "wq_t": wq_s.T, "bq": bq_s,
        "wk_t": wk.T, "bk": bk,
        "wv_t": wv.T, "bv": bv,
        "wo_t": wo.T, "bo": bo,
        "w_qkv_t": jnp.concatenate([wq_s, wk, wv], axis=0).T,   # (D, 3D)
        "b_qkv": jnp.concatenate([bq_s, bk, bv], axis=0),
    }


def _normalize_mask(mask, B, H, S):
    if mask is None:
        return None
    m = mask
    if m.ndim == 2:
        m = m[None, None]
    elif m.ndim == 3:
        m = m[:, None]
    assert m.ndim == 4, "mask must be broadcastable to (B, H, S, S)"
    assert m.shape[0] in (1, B) and m.shape[1] in (1, H)
    assert m.shape[2] in (1, S) and m.shape[3] == S
    # Compact int32 keep-mask; the compare / masked_fill happens in-kernel, so
    # no (B, 1, S, S) f32 bias array is ever written to HBM.
    # TODO(synk): int8 keep-mask would quarter the mask DMA volume.
    return (m != 0).astype(jnp.int32)


def multi_head_attention_block(q, k, v, mask, prepared, h):
    """Equivalent of MultiHeadAttentionBlock.forward (eval mode: dropout = id)."""
    B, S, D = q.shape
    d_k = D // h
    assert k.shape == v.shape and k.shape[0] == B and k.shape[2] == D
    # TODO(synk): support S_kv != S_q (encoder/decoder cross-attention lengths).
    assert k.shape[1] == S, "S_kv != S_q not supported yet"

    if q is k and k is v:
        # Self-attention: one fused QKV projection (x read from HBM once); the
        # output is reshaped (free) to (B, S, 3, h, d_k) and passed three times
        # with different projection indices -> no column-slice copies.
        qkv = linear(q.reshape(B * S, D), prepared["w_qkv_t"], prepared["b_qkv"])
        arr = qkv.reshape(B, S, 3, h, d_k)
        q_arr = k_arr = v_arr = arr
        pq, pk, pv = 0, 1, 2
    else:
        q_arr = linear(q.reshape(B * S, D), prepared["wq_t"],
                       prepared["bq"]).reshape(B, S, 1, h, d_k)
        k_arr = linear(k.reshape(B * S, D), prepared["wk_t"],
                       prepared["bk"]).reshape(B, S, 1, h, d_k)
        v_arr = linear(v.reshape(B * S, D), prepared["wv_t"],
                       prepared["bv"]).reshape(B, S, 1, h, d_k)
        pq = pk = pv = 0

    keep = _normalize_mask(mask, B, h, S)

    # Lane-dense (B, S, D) attention output; no head-merge relayout needed.
    x = flash_mha(q_arr, pq, k_arr, pk, v_arr, pv, keep, B, S, h, d_k)

    return linear(x.reshape(B * S, D), prepared["wo_t"],
                  prepared["bo"]).reshape(B, S, D)


# ------------------------- Pure-JAX reference ------------------------------ #
def reference(q, k, v, mask, params, h):
    B, S, D = q.shape
    d_k = D // h
    (wq, bq), (wk, bk), (wv, bv), (wo, bo) = params
    query = q @ wq.T + bq
    key = k @ wk.T + bk
    value = v @ wv.T + bv
    qh = query.reshape(B, S, h, d_k).transpose(0, 2, 1, 3)
    kh = key.reshape(B, S, h, d_k).transpose(0, 2, 1, 3)
    vh = value.reshape(B, S, h, d_k).transpose(0, 2, 1, 3)
    scores = jnp.einsum("bhqd,bhkd->bhqk", qh, kh) / math.sqrt(d_k)
    if mask is not None:
        scores = jnp.where(mask == 0, -1.0e9, scores)
    p = jax.nn.softmax(scores, axis=-1)
    x = jnp.einsum("bhqk,bhkd->bhqd", p, vh)
    x = x.transpose(0, 2, 1, 3).reshape(B, S, D)
    return x @ wo.T + bo


# ------------------------------- Params ------------------------------------ #
def init_linear(key, din, dout):
    k1, k2 = jax.random.split(key)
    bound = 1.0 / math.sqrt(din)
    w = jax.random.uniform(k1, (dout, din), jnp.float32, -bound, bound)
    b = jax.random.uniform(k2, (dout,), jnp.float32, -bound, bound)
    return w, b


if __name__ == "__main__":
    d_model = 32
    h = 4
    B, S = 2, 8

    key = jax.random.PRNGKey(0)
    kq, kk, kv, ko, kx1, kx2, kx3 = jax.random.split(key, 7)
    params = (
        init_linear(kq, d_model, d_model),
        init_linear(kk, d_model, d_model),
        init_linear(kv, d_model, d_model),
        init_linear(ko, d_model, d_model),
    )
    prepared = prepare_params(params, h)

    q = jax.random.normal(kx1, (B, S, d_model), jnp.float32)
    k = jax.random.normal(kx2, (B, S, d_model), jnp.float32)
    v = jax.random.normal(kx3, (B, S, d_model), jnp.float32)
    # causal mask, broadcast over heads: (B, 1, S, S), 0 == masked
    mask = jnp.broadcast_to(
        jnp.tril(jnp.ones((S, S), jnp.float32))[None, None], (B, 1, S, S))

    # Cross-attention style (distinct q/k/v): separate projection path.
    out = jax.block_until_ready(multi_head_attention_block(q, k, v, mask, prepared, h))
    ref = reference(q, k, v, mask, params, h)
    assert out.shape == (B, S, d_model)
    assert jnp.allclose(out, ref, atol=2e-3, rtol=2e-3), "cross-attention mismatch"

    # Self-attention (q is k is v): fused-QKV projection path.
    out_sa = jax.block_until_ready(multi_head_attention_block(q, q, q, mask, prepared, h))
    ref_sa = reference(q, q, q, mask, params, h)
    assert jnp.allclose(out_sa, ref_sa, atol=2e-3, rtol=2e-3), "self-attention mismatch"

    # mask=None path (PyTorch forward allows it).
    out_nm = jax.block_until_ready(multi_head_attention_block(q, k, v, None, prepared, h))
    ref_nm = reference(q, k, v, None, params, h)
    assert jnp.allclose(out_nm, ref_nm, atol=2e-3, rtol=2e-3), "no-mask mismatch"

    print("KERNEL_OK")
</pallas_src>

<mosaic_0001>
module attributes {stable_mosaic.version = 11 : i64} {
  func.func @_linear_kernel(%arg0: i32, %arg1: i32, %arg2: i32, %arg3: memref<16x32xf32, #tpu.memory_space<vmem>>, %arg4: memref<32x32xf32, #tpu.memory_space<vmem>>, %arg5: memref<1x32xf32, #tpu.memory_space<vmem>>, %arg6: memref<16x32xf32, #tpu.memory_space<vmem>>, %arg7: memref<16x32xf32, #tpu.memory_space<vmem>>) attributes {dimension_semantics = [#tpu.dimension_semantics<parallel>, #tpu.dimension_semantics<parallel>, #tpu.dimension_semantics<arbitrary>], iteration_bounds = array<i64: 1, 1, 1>, scalar_prefetch = 0 : i64, scratch_operands = 1 : i64, tpu.core_type = #tpu.core_type<tc>, window_params = [{transform_indices = @transform_0, window_bounds = array<i64: 16, 32>}, {transform_indices = @transform_1, window_bounds = array<i64: 32, 32>}, {transform_indices = @transform_2, window_bounds = array<i64: 1, 32>}, {transform_indices = @transform_3, window_bounds = array<i64: 16, 32>}]} {
    %c0_i32 = arith.constant 0 : i32
    %0 = arith.cmpi eq, %arg2, %c0_i32 : i32
    %1 = arith.extui %0 : i1 to i32
    %c0_i32_0 = arith.constant 0 : i32
    %2 = arith.cmpi ne, %1, %c0_i32_0 : i32
    scf.if %2 {
      %cst_10 = arith.constant 0.000000e+00 : f32
      %12 = vector.broadcast %cst_10 : f32 to vector<16x32xf32>
      %c0_11 = arith.constant 0 : index
      %c0_12 = arith.constant 0 : index
      %13 = vector.load %arg7[%c0_11, %c0_12] : memref<16x32xf32, #tpu.memory_space<vmem>>, vector<16x32xf32>
      tpu.vector_store %arg7[%c0_11, %c0_12], %12 {strides = array<i32>} : memref<16x32xf32, #tpu.memory_space<vmem>>, vector<16x32xf32>,
    } else {
    }
    %c0 = arith.constant 0 : index
    %c0_1 = arith.constant 0 : index
    %3 = vector.load %arg7[%c0, %c0_1] : memref<16x32xf32, #tpu.memory_space<vmem>>, vector<16x32xf32>
    %c0_2 = arith.constant 0 : index
    %c0_3 = arith.constant 0 : index
    %4 = vector.load %arg3[%c0_2, %c0_3] : memref<16x32xf32, #tpu.memory_space<vmem>>, vector<16x32xf32>
    %c0_4 = arith.constant 0 : index
    %c0_5 = arith.constant 0 : index
    %5 = vector.load %arg4[%c0_4, %c0_5] : memref<32x32xf32, #tpu.memory_space<vmem>>, vector<32x32xf32>
    %cst = arith.constant dense<0.000000e+00> : vector<16x32xf32>
    %6 = tpu.matmul %4, %5, %cst {dimension_numbers = #tpu.dot_dimension_numbers<[1], [0], [0], [1], [0, 0, 1, 1], [], []>} : vector<16x32xf32>, vector<32x32xf32>, vector<16x32xf32> -> vector<16x32xf32>
    %7 = arith.addf %3, %6 : vector<16x32xf32>
    %c0_6 = arith.constant 0 : index
    %c0_7 = arith.constant 0 : index
    %8 = vector.load %arg7[%c0_6, %c0_7] : memref<16x32xf32, #tpu.memory_space<vmem>>, vector<16x32xf32>
    tpu.vector_store %arg7[%c0_6, %c0_7], %7 {strides = array<i32>} : memref<16x32xf32, #tpu.memory_space<vmem>>, vector<16x32xf32>,
    %c0_i32_8 = arith.constant 0 : i32
    %9 = arith.cmpi eq, %arg2, %c0_i32_8 : i32
    %10 = arith.extui %9 : i1 to i32
    %c0_i32_9 = arith.constant 0 : i32
    %11 = arith.cmpi ne, %10, %c0_i32_9 : i32
    scf.if %11 {
      %c0_10 = arith.constant 0 : index
      %c0_11 = arith.constant 0 : index
      %12 = vector.load %arg7[%c0_10, %c0_11] : memref<16x32xf32, #tpu.memory_space<vmem>>, vector<16x32xf32>
      %c0_12 = arith.constant 0 : index
      %c0_13 = arith.constant 0 : index
      %13 = vector.load %arg5[%c0_12, %c0_13] : memref<1x32xf32, #tpu.memory_space<vmem>>, vector<1x32xf32>
      %14 = vector.broadcast %13 : vector<1x32xf32> to vector<16x32xf32>
      %15 = arith.addf %12, %14 : vector<16x32xf32>
      %c0_14 = arith.constant 0 : index
      %c0_15 = arith.constant 0 : index
      %16 = vector.load %arg6[%c0_14, %c0_15] : memref<16x32xf32, #tpu.memory_space<vmem>>, vector<16x32xf32>
      tpu.vector_store %arg6[%c0_14, %c0_15], %15 {strides = array<i32>} : memref<16x32xf32, #tpu.memory_space<vmem>>, vector<16x32xf32>,
    } else {
    }
    return
  }
  func.func @transform_0(%arg0: i32, %arg1: i32, %arg2: i32) -> (i32, i32) {
    %c0_i32 = arith.constant 0 : i32
    return %arg0, %arg2 : i32, i32
  }
  func.func @transform_1(%arg0: i32, %arg1: i32, %arg2: i32) -> (i32, i32) {
    %c0_i32 = arith.constant 0 : i32
    return %arg2, %arg1 : i32, i32
  }
  func.func @transform_2(%arg0: i32, %arg1: i32, %arg2: i32) -> (i32, i32) {
    %c0_i32 = arith.constant 0 : i32
    %c0_i32_0 = arith.constant 0 : i32
    return %c0_i32, %arg1 : i32, i32
  }
  func.func @transform_3(%arg0: i32, %arg1: i32, %arg2: i32) -> (i32, i32) {
    %c0_i32 = arith.constant 0 : i32
    return %arg0, %arg1 : i32, i32
  }
}

</mosaic_0001>

<llo_original>
// kernel: tpu_custom_call.1
$region0: #{tpu_custom_call.1}
  #allocation0 [shape = 'u32[]', space=smem, size = 0x4, offset = 0x4, fixed_abs, tag = 'smem constant byte address 0x4 - core index']
  #allocation1 [shape = 'u32[72,128]{1,0:T(1,128)}', space=vmem, size = 0x9000, scoped, tag = 'internal scratch']
  #allocation2 [shape = 'f32[16,32]{1,0:T(8,128)}', space=vmem, size = 0x2000, scoped, tag = 'scratch operand']
  %s0 = inlined_call_operand.hbm [shape: f32[16,32], index: 0, kind: input, shape index: {}]
  %s1 = inlined_call_operand.hbm [shape: f32[32,32], index: 1, kind: input, shape index: {}]
  %s2 = inlined_call_operand.vmem [shape: f32[1,32], index: 2, kind: input, shape index: {}]
  %s3 = inlined_call_operand.hbm [shape: f32[16,32], index: 3, kind: output, shape index: {}]
  %s4 = sld [smem:[#allocation0]]
  $region38: #{tpu_custom_call.1} parent=0
    _
  %s6 = ssub.s32 1, %s4
  %s7 = scalar_select 0, %s6, %s4
  $region1: #{tpu_custom_call.1} parent=0
    #allocation3 [shape = 'u8[8192]{0}', space=vmem, size = 0x2000, scoped, tag = 'input window, operand 0, single buffered']
    #allocation4 [shape = 's32[1]{0}', space=sflag, size = 0x4, scoped, tag = 'scoped memory for tpu_custom_call.1']
    #allocation5 [shape = 's32[1]{0}', space=sflag, size = 0x4, scoped, tag = 'scoped memory for tpu_custom_call.1']
    #allocation6 [shape = 'u8[16384]{0}', space=vmem, size = 0x4000, scoped, tag = 'input window, operand 1, single buffered']
    #allocation7 [shape = 's32[1]{0}', space=sflag, size = 0x4, scoped, tag = 'scoped memory for tpu_custom_call.1']
    #allocation8 [shape = 'u8[8192]{0}', space=vmem, size = 0x2000, scoped, tag = 'output window, operand 0, single buffered']
    %8 = vsyncpa [#allocation4], 0
    %9 = vsyncpa [#allocation7], 0
    %10 = vsyncpa [#allocation5], 0
    // Predicated region
    $region2: #{tpu_custom_call.1} parent=1 // pred_check
      _
    $region3: #{tpu_custom_call.1} parent=1 // pred_check_branch
      %12 = sbr.rel (0) target = $region5
    $region4: #{tpu_custom_call.1} parent=1 // pred_region
      %14 = vsyncadd [#allocation4], 0
      %s15 = sshll.u32 %s0, 4
      %s16 = int_to_ptr.hbm [resolvable:$true] %s15
      %s17 = sshll.u32 [#allocation3], 4
      %s18 = int_to_ptr.vmem [resolvable:$true] %s17
      %23 = dma.hbm_to_vmem [thread:$0]  %s16, 256, %s18, [#allocation4], 128, 128, 8
    $region5: #{tpu_custom_call.1} parent=1 // pred_fallthru
      _
    // Predicated region
    $region6: #{tpu_custom_call.1} parent=1 // pred_check
      _
    $region7: #{tpu_custom_call.1} parent=1 // pred_check_branch
      %25 = sbr.rel (0) target = $region9
    $region8: #{tpu_custom_call.1} parent=1 // pred_region
      %27 = vsyncadd [#allocation7], 0
      %s28 = sshll.u32 %s1, 4
      %s29 = int_to_ptr.hbm [resolvable:$true] %s28
      %s30 = sshll.u32 [#allocation6], 4
      %s31 = int_to_ptr.vmem [resolvable:$true] %s30
      %36 = dma.hbm_to_vmem [thread:$0]  %s29, 512, %s31, [#allocation7], 128, 128, 8
    $region9: #{tpu_custom_call.1} parent=1 // pred_fallthru
      _
    // Predicated region
    $region10: #{tpu_custom_call.1} parent=1 // pred_check
      _
    $region11: #{tpu_custom_call.1} parent=1 // pred_check_branch
      %38 = sbr.rel (0) target = $region13
    $region12: #{tpu_custom_call.1} parent=1 // pred_region
      _
    $region13: #{tpu_custom_call.1} parent=1 // pred_fallthru
      _
    // Predicated region
    $region14: #{tpu_custom_call.1} parent=1 // pred_check
      _
    $region15: #{tpu_custom_call.1} parent=1 // pred_check_branch
      %40 = sbr.rel (0) target = $region17
    $region16: #{tpu_custom_call.1} parent=1 // pred_region
      %42 = dma.done [#allocation4], 256
    $region17: #{tpu_custom_call.1} parent=1 // pred_fallthru
      _
    // Predicated region
    $region18: #{tpu_custom_call.1} parent=1 // pred_check
      _
    $region19: #{tpu_custom_call.1} parent=1 // pred_check_branch
      %44 = sbr.rel (0) target = $region21
    $region20: #{tpu_custom_call.1} parent=1 // pred_region
      %46 = dma.done [#allocation7], 512
    $region21: #{tpu_custom_call.1} parent=1 // pred_fallthru
      _
    %p47 = scmp.eq.s32.totalorder 0, 0
    // Predicated region
    $region22: #{tpu_custom_call.1} parent=1 // pred_check
      %p48 = pneg %p47
    $region23: #{tpu_custom_call.1} parent=1 // pred_check_branch
      %50 = sbr.rel (%p48) target = $region25
    $region24: #{tpu_custom_call.1} parent=1 // pred_region
      %vm51 = vcmask 261120
      %52 = vst.msk [vmem:[#allocation2] sm:$0xff] %vm51, 0.0
      %53 = vst.msk [vmem:[#allocation2 + $0x8] sm:$0xff] %vm51, 0.0
    $region25: #{tpu_custom_call.1} parent=1 // pred_fallthru
      _
    %v54 = vld [vmem:[#allocation2] sm:$0xff]
    %v55 = vld [vmem:[#allocation2 + $0x8] sm:$0xff]
    %v56 = vld [vmem:[#allocation3] sm:$0xff]
    %v57 = vld [vmem:[#allocation3 + $0x8] sm:$0xff]
    %v58 = vld [vmem:[#allocation6] sm:$0xff]
    %v59 = vld [vmem:[#allocation6 + $0x8] sm:$0xff]
    %v60 = vld [vmem:[#allocation6 + $0x10] sm:$0xff]
    %v61 = vld [vmem:[#allocation6 + $0x18] sm:$0xff]
    %vm62 = vcmask 261120
    %v64 = vsel %vm62, %v56, 0
    %v67 = vsel %vm62, %v57, 0
    %69 = vmatpush.msra.mxu0 0.0
    %70 = vmatpush.msra.mxu0 0.0
    %71 = vmatpush.msra.mxu0 0.0
    %72 = vmatpush.msra.mxu0 0.0
    %73 = vmatpush.msra.mxu0 0.0
    %74 = vmatpush.msra.mxu0 0.0
    %75 = vmatpush.msra.mxu0 0.0
    %76 = vmatpush.msra.mxu0 0.0
    %77 = vmatpush.msra.mxu0 0.0
    %78 = vmatpush.msra.mxu0 0.0
    %79 = vmatpush.msra.mxu0 0.0
    %80 = vmatpush.msra.mxu0 0.0
    %81 = vmatpush.msra.mxu0 %v61
    %82 = vmatpush.msra.mxu0 %v60
    %83 = vmatpush.msra.mxu0 %v59
    %84 = vmatpush.msra.mxu0 %v58
    %85 = vmatmul.f32.gmra.mxu0 %v64
    %v86 = vpop.f32.mrf.mxu0
    %v87 = vadd.f32 0.0, %v86
    %88 = vmatmul.f32.gmra.mxu0 %v67
    %v89 = vpop.f32.mrf.mxu0
    %v90 = vadd.f32 0.0, %v89
    %91 = vdwg.mxu0
    %v92 = vadd.f32 %v54, %v87
    %v93 = vadd.f32 %v55, %v90
    %94 = vst.msk [vmem:[#allocation2] sm:$0xff] %vm62, %v92
    %95 = vst.msk [vmem:[#allocation2 + $0x8] sm:$0xff] %vm62, %v93
    // Predicated region
    $region26: #{tpu_custom_call.1} parent=1 // pred_check
      %p96 = pneg %p47
    $region27: #{tpu_custom_call.1} parent=1 // pred_check_branch
      %98 = sbr.rel (%p96) target = $region29
    $region28: #{tpu_custom_call.1} parent=1 // pred_region
      %v99 = vld [vmem:[#allocation2] sm:$0xff]
      %v100 = vld [vmem:[#allocation2 + $0x8] sm:$0xff]
      %v101 = vld [vmem:[%s2] sm:$0x1]
      %v103 = vperm.slane %v101, 0
      %v105 = vadd.f32 %v99, %v103
      %v106 = vadd.f32 %v100, %v103
      %107 = vst.msk [vmem:[#allocation8] sm:$0xff] %vm62, %v105
      %108 = vst.msk [vmem:[#allocation8 + $0x8] sm:$0xff] %vm62, %v106
    $region29: #{tpu_custom_call.1} parent=1 // pred_fallthru
      _
    // Predicated region
    $region30: #{tpu_custom_call.1} parent=1 // pred_check
      _
    $region31: #{tpu_custom_call.1} parent=1 // pred_check_branch
      %110 = sbr.rel (0) target = $region33
    $region32: #{tpu_custom_call.1} parent=1 // pred_region
      %112 = vsyncadd [#allocation5], 0
      %s113 = sshll.u32 [#allocation8], 4
      %s114 = int_to_ptr.vmem [resolvable:$true] %s113
      %s115 = sshll.u32 %s3, 4
      %s116 = int_to_ptr.hbm [resolvable:$true] %s115
      %121 = dma.vmem_to_hbm [thread:$0]  %s114, 256, %s116, [#allocation5], 128, 128, 8
    $region33: #{tpu_custom_call.1} parent=1 // pred_fallthru
      _
    // Predicated region
    $region34: #{tpu_custom_call.1} parent=1 // pred_check
      _
    $region35: #{tpu_custom_call.1} parent=1 // pred_check_branch
      %123 = sbr.rel (0) target = $region37
    $region36: #{tpu_custom_call.1} parent=1 // pred_region
      %125 = dma.done [#allocation5], 256
    $region37: #{tpu_custom_call.1} parent=1 // pred_fallthru
      _
    %126 = vsyncpa [#allocation4], 1
    %127 = vsyncpa [#allocation7], 1
    %128 = vsyncpa [#allocation5], 1

</llo_original>
